<compile_context>
chip_gen: v7x
topology: tpu7x:2x2x1
jax: 0.10.0
libtpu: 0.0.40
codegen_flags: <defaults>
</compile_context>

<pallas_src>
import math
import functools

import jax
import jax.numpy as jnp
from jax.experimental import pallas as pl
from jax.experimental.pallas import tpu as pltpu


# ---------------------------------------------------------------------------
# Kernel 1: streaming per-row statistics.
#   x2d: (BC, N) tiled as (tile_r, tile_n); grid = (rows, n_tiles), n last.
#   Outputs (accumulators resident across the n axis):
#     mean_ref: (tile_r, 1) running mean of the row
#     m2_ref:   (tile_r, 1) running centered second moment sum((x - mean)^2)
# ---------------------------------------------------------------------------
def _stats_kernel(x_ref, mean_ref, m2_ref):
    n = pl.program_id(1)
    xt = x_ref[...].astype(jnp.float32)                    # per-tile upcast
    tn = xt.shape[1]                                       # static tile width
    tmean = jnp.mean(xt, axis=1, keepdims=True)            # (tr, 1)  XLU reduce
    d = xt - tmean
    tm2 = jnp.sum(d * d, axis=1, keepdims=True)            # (tr, 1)  XLU reduce

    @pl.when(n == 0)
    def _():
        mean_ref[...] = tmean
        m2_ref[...] = tm2

    @pl.when(n > 0)
    def _():
        # Chan parallel-variance combine of the running stats with this tile.
        cnt_a = (n * tn).astype(jnp.float32)               # elements already folded
        inv_new = 1.0 / (cnt_a + float(tn))                # scalar path, cheap
        mean_a = mean_ref[...]
        delta = tmean - mean_a
        mean_ref[...] = mean_a + delta * (float(tn) * inv_new)
        m2_ref[...] = (m2_ref[...] + tm2
                       + delta * delta * (cnt_a * float(tn) * inv_new))


# ---------------------------------------------------------------------------
# Kernel 2: normalize pass, y = x * scale + shift  (2 VPU ops / element,
# lane-dense full-tile stores, both grid axes parallel for megacore sharding).
# ---------------------------------------------------------------------------
def _affine_kernel(x_ref, scale_ref, shift_ref, o_ref):
    x = x_ref[...].astype(jnp.float32)
    o_ref[...] = (x * scale_ref[...] + shift_ref[...]).astype(o_ref.dtype)


# ---------------------------------------------------------------------------
# Tile selection helpers.
# ---------------------------------------------------------------------------
def _pick_tile(full, quantum, cap):
    """Largest size <= cap that is a multiple of `quantum` and divides `full`;
    falls back to the full extent (single block) when no clean tiling exists."""
    if full <= cap:
        return full
    if full % quantum:
        # TODO(synk): ragged extents would need in-kernel masking; use one block.
        return full
    t = (cap // quantum) * quantum
    while t >= quantum:
        if full % t == 0:
            return t
        t -= quantum
    return full


def _pick_tiles(bc, n, itemsize):
    """~4 MiB x-blocks: double-buffered in + out in the normalize pass stays
    <= 16 MiB of VMEM (inside the 32 MiB scoped limit and the v7x 64 MiB
    physical VMEM) while keeping per-grid-step overhead (~0.35 us) amortized."""
    block_budget = 4 * 1024 * 1024
    tile_n = _pick_tile(n, 128, 2048)
    max_r = max(8, block_budget // max(1, tile_n * itemsize))
    tile_r = _pick_tile(bc, 8, min(512, max_r))
    return tile_r, tile_n


# ---------------------------------------------------------------------------
# Wrapper: full SwitchableNormND forward.
# ---------------------------------------------------------------------------
def switchable_norm_nd(x, weight, bias, mean_weight, var_weight,
                       running_mean, running_var, *,
                       eps=1e-8, momentum=0.1,
                       training=True, using_moving_average=True,
                       using_bn=True):
    """Forward of SwitchableNormND. Returns (y, new_running_mean, new_running_var)."""
    B, C = x.shape[:2]
    shape2 = list(x.shape[2:])
    N = math.prod(shape2) if x.ndim > 2 else 1
    BC = B * C

    x2d = x.reshape(BC, N)          # rows = (b, c) pairs; spatial dense on lanes

    tile_r, tile_n = _pick_tiles(BC, N, jnp.dtype(x.dtype).itemsize)
    grid_r = BC // tile_r
    grid_n = N // tile_n

    vmem_limit = 32 * 1024 * 1024
    cp_stats = pltpu.CompilerParams(
        dimension_semantics=("parallel", "arbitrary"),
        vmem_limit_bytes=vmem_limit)
    cp_norm = pltpu.CompilerParams(
        dimension_semantics=("parallel", "parallel"),
        vmem_limit_bytes=vmem_limit)

    # ---- pass 1: per-(b, c) row mean / M2 in a single read of x --------------
    row_mean, row_m2 = pl.pallas_call(
        _stats_kernel,
        out_shape=(jax.ShapeDtypeStruct((BC, 1), jnp.float32),
                   jax.ShapeDtypeStruct((BC, 1), jnp.float32)),
        grid=(grid_r, grid_n),
        in_specs=[pl.BlockSpec((tile_r, tile_n), lambda r, n: (r, n))],
        out_specs=(pl.BlockSpec((tile_r, 1), lambda r, n: (r, 0)),
                   pl.BlockSpec((tile_r, 1), lambda r, n: (r, 0))),
        compiler_params=cp_stats,
    )(x2d)

    mean_rc = row_mean.reshape(B, C)
    m2_rc = row_m2.reshape(B, C)
    Nf = float(N)

    # ---- tiny combines (pure JAX; exact Chan combination, equal group sizes) -
    if N >= 2:                                        # instance norm
        mean_in = mean_rc
        var_in = m2_rc / (N - 1)
    else:
        mean_in = jnp.zeros((), jnp.float32)
        var_in = jnp.ones((), jnp.float32)

    if C * N >= 2:                                    # layer norm (combine over C)
        mean_ln = jnp.mean(mean_rc, axis=1, keepdims=True)               # (B, 1)
        m2_ln = (jnp.sum(m2_rc, axis=1, keepdims=True)
                 + Nf * jnp.sum((mean_rc - mean_ln) ** 2, axis=1, keepdims=True))
        var_ln = m2_ln / (C * N - 1)
    else:
        mean_ln = jnp.zeros((), jnp.float32)
        var_ln = jnp.ones((), jnp.float32)

    if using_bn:
        if training:
            if B * C >= 2:                            # batch norm (combine over B)
                mean_bn = jnp.mean(mean_rc, axis=0, keepdims=True)       # (1, C)
                m2_bn = (jnp.sum(m2_rc, axis=0, keepdims=True)
                         + Nf * jnp.sum((mean_rc - mean_bn) ** 2,
                                        axis=0, keepdims=True))
                var_bn = m2_bn / (B * N - 1)
            else:
                mean_bn = jnp.zeros((), jnp.float32)
                var_bn = jnp.ones((), jnp.float32)
            mean_bn_buf = jnp.broadcast_to(mean_bn, (1, C)).reshape(1, C, 1)
            var_bn_buf = jnp.broadcast_to(var_bn, (1, C)).reshape(1, C, 1)
            if using_moving_average:
                running_mean = (1.0 - momentum) * running_mean + momentum * mean_bn_buf
                running_var = (1.0 - momentum) * running_var + momentum * var_bn_buf
            else:
                running_mean = mean_bn_buf
                running_var = var_bn_buf
        else:
            mean_bn = running_mean.reshape(1, C).astype(jnp.float32)
            var_bn = running_var.reshape(1, C).astype(jnp.float32)

    mw = jax.nn.softmax(mean_weight.astype(jnp.float32))
    vw = jax.nn.softmax(var_weight.astype(jnp.float32))
    if using_bn:
        mean = mw[0] * mean_in + mw[1] * mean_ln + mw[2] * mean_bn
        var = vw[0] * var_in + vw[1] * var_ln + vw[2] * var_bn
    else:
        mean = mw[0] * mean_in + mw[1] * mean_ln
        var = vw[0] * var_in + vw[1] * var_ln
    mean = jnp.broadcast_to(mean, (B, C))
    var = jnp.broadcast_to(var, (B, C))

    # ---- fold mixture + affine into per-(b, c) scale / shift -----------------
    inv = jax.lax.rsqrt(var + eps)                                        # (B, C)
    gamma = (weight.reshape(1, C).astype(jnp.float32)
             if weight is not None else jnp.ones((1, C), jnp.float32))
    beta = (bias.reshape(1, C).astype(jnp.float32)
            if bias is not None else jnp.zeros((1, C), jnp.float32))
    scale = gamma * inv                                                   # (B, C)
    shift = beta - mean * scale                                           # (B, C)
    scale2d = scale.reshape(BC, 1)
    shift2d = shift.reshape(BC, 1)

    # ---- pass 2: tiled normalize, double-buffered, both axes parallel --------
    # scale/shift index_maps are constant along n, so those tiny blocks stay
    # resident in VMEM across the inner grid axis (no per-step re-DMA).
    y2d = pl.pallas_call(
        _affine_kernel,
        out_shape=jax.ShapeDtypeStruct((BC, N), x.dtype),
        grid=(grid_r, grid_n),
        in_specs=[pl.BlockSpec((tile_r, tile_n), lambda r, n: (r, n)),
                  pl.BlockSpec((tile_r, 1), lambda r, n: (r, 0)),
                  pl.BlockSpec((tile_r, 1), lambda r, n: (r, 0))],
        out_specs=pl.BlockSpec((tile_r, tile_n), lambda r, n: (r, n)),
        compiler_params=cp_norm,
    )(x2d, scale2d, shift2d)

    y = y2d.reshape([B, C] + shape2)
    return y, running_mean, running_var


# ---------------------------------------------------------------------------
# Pure-JAX reference of the PyTorch training-mode forward (using_bn=True).
# ---------------------------------------------------------------------------
def _reference(x, weight, bias, mean_weight, var_weight,
               running_mean, running_var, eps, momentum):
    B, C = x.shape[:2]
    shape2 = list(x.shape[2:])
    N = math.prod(shape2)
    xr = x.reshape(B, C, N).astype(jnp.float32)

    mean_in = jnp.mean(xr, 2, keepdims=True)
    var_in = jnp.var(xr, 2, keepdims=True, ddof=1)
    mean_ln = jnp.mean(xr, (1, 2), keepdims=True)
    var_ln = jnp.var(xr, (1, 2), keepdims=True, ddof=1)
    mean_bn = jnp.mean(xr, (0, 2), keepdims=True)
    var_bn = jnp.var(xr, (0, 2), keepdims=True, ddof=1)

    mw = jax.nn.softmax(mean_weight)
    vw = jax.nn.softmax(var_weight)
    mean = mw[0] * mean_in + mw[1] * mean_ln + mw[2] * mean_bn
    var = vw[0] * var_in + vw[1] * var_ln + vw[2] * var_bn
    y = (xr - mean) * jax.lax.rsqrt(var + eps)
    y = y * weight + bias
    rm = (1.0 - momentum) * running_mean + momentum * mean_bn
    rv = (1.0 - momentum) * running_var + momentum * var_bn
    return y.reshape([B, C] + shape2), rm, rv


if __name__ == "__main__":
    # Module config: SwitchableNormND(N=2, num_features=4)
    B, C, H, W = 2, 4, 16, 16
    eps, momentum = 1e-8, 0.1

    key = jax.random.PRNGKey(0)
    x = jax.random.normal(key, (B, C, H, W), dtype=jnp.float32)

    # Deterministic parameter init matching __init__
    weight = jnp.full((1, C, 1), 1.0, dtype=jnp.float32)       # gamma_init=1.0
    bias = jnp.full((1, C, 1), 0.0, dtype=jnp.float32)         # bias_init=0.0
    mean_weight = jnp.ones((3,), dtype=jnp.float32)            # using_bn -> 3 weights
    var_weight = jnp.ones((3,), dtype=jnp.float32)
    running_mean = jnp.zeros((1, C, 1), dtype=jnp.float32)
    running_var = jnp.zeros((1, C, 1), dtype=jnp.float32)

    fwd = jax.jit(functools.partial(
        switchable_norm_nd, eps=eps, momentum=momentum,
        training=True, using_moving_average=True, using_bn=True))
    y, new_rm, new_rv = fwd(x, weight, bias, mean_weight, var_weight,
                            running_mean, running_var)
    jax.block_until_ready((y, new_rm, new_rv))

    # Correctness check against a pure-JAX reference of the torch forward.
    y_ref, rm_ref, rv_ref = _reference(x, weight, bias, mean_weight, var_weight,
                                       running_mean, running_var, eps, momentum)
    assert y.shape == (B, C, H, W)
    assert jnp.max(jnp.abs(y - y_ref)) < 1e-4, "output mismatch vs reference"
    assert jnp.max(jnp.abs(new_rm - rm_ref)) < 1e-5, "running_mean mismatch"
    assert jnp.max(jnp.abs(new_rv - rv_ref)) < 1e-5, "running_var mismatch"

    print("KERNEL_OK")
</pallas_src>

<mosaic_0001>
module attributes {stable_mosaic.version = 11 : i64} {
  func.func @_stats_kernel(%arg0: i32, %arg1: i32, %arg2: memref<8x256xf32, #tpu.memory_space<vmem>>, %arg3: memref<8x1xf32, #tpu.memory_space<vmem>>, %arg4: memref<8x1xf32, #tpu.memory_space<vmem>>) attributes {dimension_semantics = [#tpu.dimension_semantics<parallel>, #tpu.dimension_semantics<arbitrary>], iteration_bounds = array<i64: 1, 1>, scalar_prefetch = 0 : i64, scratch_operands = 0 : i64, tpu.core_type = #tpu.core_type<tc>, window_params = [{transform_indices = @transform_0, window_bounds = array<i64: 8, 256>}, {transform_indices = @transform_1, window_bounds = array<i64: 8, 1>}, {transform_indices = @transform_2, window_bounds = array<i64: 8, 1>}]} {
    %c0 = arith.constant 0 : index
    %c0_0 = arith.constant 0 : index
    %0 = vector.load %arg2[%c0, %c0_0] : memref<8x256xf32, #tpu.memory_space<vmem>>, vector<8x256xf32>
    %cst = arith.constant dense<0.000000e+00> : vector<8xf32>
    %1 = vector.multi_reduction <add>, %0, %cst [1] : vector<8x256xf32> to vector<8xf32>
    %2 = vector.shape_cast %1 : vector<8xf32> to vector<8x1xf32>
    %cst_1 = arith.constant 2.560000e+02 : f32
    %3 = vector.broadcast %cst_1 : f32 to vector<8x1xf32>
    %4 = arith.divf %2, %3 : vector<8x1xf32>
    %5 = vector.broadcast %4 : vector<8x1xf32> to vector<8x256xf32>
    %6 = arith.subf %0, %5 : vector<8x256xf32>
    %7 = arith.mulf %6, %6 : vector<8x256xf32>
    %cst_2 = arith.constant dense<0.000000e+00> : vector<8xf32>
    %8 = vector.multi_reduction <add>, %7, %cst_2 [1] : vector<8x256xf32> to vector<8xf32>
    %9 = vector.shape_cast %8 : vector<8xf32> to vector<8x1xf32>
    %c0_i32 = arith.constant 0 : i32
    %10 = arith.cmpi eq, %arg1, %c0_i32 : i32
    %11 = arith.extui %10 : i1 to i32
    %c0_i32_3 = arith.constant 0 : i32
    %12 = arith.cmpi ne, %11, %c0_i32_3 : i32
    scf.if %12 {
      %c0_6 = arith.constant 0 : index
      %c0_7 = arith.constant 0 : index
      %16 = vector.load %arg3[%c0_6, %c0_7] : memref<8x1xf32, #tpu.memory_space<vmem>>, vector<8x1xf32>
      tpu.vector_store %arg3[%c0_6, %c0_7], %4 {strides = array<i32>} : memref<8x1xf32, #tpu.memory_space<vmem>>, vector<8x1xf32>,
      %c0_8 = arith.constant 0 : index
      %c0_9 = arith.constant 0 : index
      %17 = vector.load %arg4[%c0_8, %c0_9] : memref<8x1xf32, #tpu.memory_space<vmem>>, vector<8x1xf32>
      tpu.vector_store %arg4[%c0_8, %c0_9], %9 {strides = array<i32>} : memref<8x1xf32, #tpu.memory_space<vmem>>, vector<8x1xf32>,
    } else {
    }
    %c0_i32_4 = arith.constant 0 : i32
    %13 = arith.cmpi sgt, %arg1, %c0_i32_4 : i32
    %14 = arith.extui %13 : i1 to i32
    %c0_i32_5 = arith.constant 0 : i32
    %15 = arith.cmpi ne, %14, %c0_i32_5 : i32
    scf.if %15 {
      %c256_i32 = arith.constant 256 : i32
      %16 = arith.muli %arg1, %c256_i32 : i32
      %17 = arith.sitofp %16 : i32 to f32
      %cst_6 = arith.constant 2.560000e+02 : f32
      %18 = arith.addf %17, %cst_6 : f32
      %cst_7 = arith.constant 1.000000e+00 : f32
      %19 = arith.divf %cst_7, %18 : f32
      %c0_8 = arith.constant 0 : index
      %c0_9 = arith.constant 0 : index
      %20 = vector.load %arg3[%c0_8, %c0_9] : memref<8x1xf32, #tpu.memory_space<vmem>>, vector<8x1xf32>
      %21 = arith.subf %4, %20 : vector<8x1xf32>
      %cst_10 = arith.constant 2.560000e+02 : f32
      %22 = arith.mulf %cst_10, %19 : f32
      %23 = vector.broadcast %22 : f32 to vector<8x1xf32>
      %24 = arith.mulf %21, %23 : vector<8x1xf32>
      %25 = arith.addf %20, %24 : vector<8x1xf32>
      %c0_11 = arith.constant 0 : index
      %c0_12 = arith.constant 0 : index
      %26 = vector.load %arg3[%c0_11, %c0_12] : memref<8x1xf32, #tpu.memory_space<vmem>>, vector<8x1xf32>
      tpu.vector_store %arg3[%c0_11, %c0_12], %25 {strides = array<i32>} : memref<8x1xf32, #tpu.memory_space<vmem>>, vector<8x1xf32>,
      %c0_13 = arith.constant 0 : index
      %c0_14 = arith.constant 0 : index
      %27 = vector.load %arg4[%c0_13, %c0_14] : memref<8x1xf32, #tpu.memory_space<vmem>>, vector<8x1xf32>
      %28 = arith.addf %27, %9 : vector<8x1xf32>
      %29 = arith.mulf %21, %21 : vector<8x1xf32>
      %cst_15 = arith.constant 2.560000e+02 : f32
      %30 = arith.mulf %17, %cst_15 : f32
      %31 = arith.mulf %30, %19 : f32
      %32 = vector.broadcast %31 : f32 to vector<8x1xf32>
      %33 = arith.mulf %29, %32 : vector<8x1xf32>
      %34 = arith.addf %28, %33 : vector<8x1xf32>
      %c0_16 = arith.constant 0 : index
      %c0_17 = arith.constant 0 : index
      %35 = vector.load %arg4[%c0_16, %c0_17] : memref<8x1xf32, #tpu.memory_space<vmem>>, vector<8x1xf32>
      tpu.vector_store %arg4[%c0_16, %c0_17], %34 {strides = array<i32>} : memref<8x1xf32, #tpu.memory_space<vmem>>, vector<8x1xf32>,
    } else {
    }
    return
  }
  func.func @transform_0(%arg0: i32, %arg1: i32) -> (i32, i32) {
    %c0_i32 = arith.constant 0 : i32
    return %arg0, %arg1 : i32, i32
  }
  func.func @transform_1(%arg0: i32, %arg1: i32) -> (i32, i32) {
    %c0_i32 = arith.constant 0 : i32
    %c0_i32_0 = arith.constant 0 : i32
    return %arg0, %c0_i32 : i32, i32
  }
  func.func @transform_2(%arg0: i32, %arg1: i32) -> (i32, i32) {
    %c0_i32 = arith.constant 0 : i32
    %c0_i32_0 = arith.constant 0 : i32
    return %arg0, %c0_i32 : i32, i32
  }
}

module attributes {stable_mosaic.version = 11 : i64} {
  func.func @_affine_kernel(%arg0: i32, %arg1: i32, %arg2: memref<8x256xf32, #tpu.memory_space<vmem>>, %arg3: memref<8x1xf32, #tpu.memory_space<vmem>>, %arg4: memref<8x1xf32, #tpu.memory_space<vmem>>, %arg5: memref<8x256xf32, #tpu.memory_space<vmem>>) attributes {dimension_semantics = [#tpu.dimension_semantics<parallel>, #tpu.dimension_semantics<parallel>], iteration_bounds = array<i64: 1, 1>, scalar_prefetch = 0 : i64, scratch_operands = 0 : i64, tpu.core_type = #tpu.core_type<tc>, window_params = [{transform_indices = @transform_0, window_bounds = array<i64: 8, 256>}, {transform_indices = @transform_1, window_bounds = array<i64: 8, 1>}, {transform_indices = @transform_2, window_bounds = array<i64: 8, 1>}, {transform_indices = @transform_3, window_bounds = array<i64: 8, 256>}]} {
    %c0 = arith.constant 0 : index
    %c0_0 = arith.constant 0 : index
    %0 = vector.load %arg2[%c0, %c0_0] : memref<8x256xf32, #tpu.memory_space<vmem>>, vector<8x256xf32>
    %c0_1 = arith.constant 0 : index
    %c0_2 = arith.constant 0 : index
    %1 = vector.load %arg3[%c0_1, %c0_2] : memref<8x1xf32, #tpu.memory_space<vmem>>, vector<8x1xf32>
    %2 = vector.broadcast %1 : vector<8x1xf32> to vector<8x256xf32>
    %3 = arith.mulf %0, %2 : vector<8x256xf32>
    %c0_3 = arith.constant 0 : index
    %c0_4 = arith.constant 0 : index
    %4 = vector.load %arg4[%c0_3, %c0_4] : memref<8x1xf32, #tpu.memory_space<vmem>>, vector<8x1xf32>
    %5 = vector.broadcast %4 : vector<8x1xf32> to vector<8x256xf32>
    %6 = arith.addf %3, %5 : vector<8x256xf32>
    %c0_5 = arith.constant 0 : index
    %c0_6 = arith.constant 0 : index
    %7 = vector.load %arg5[%c0_5, %c0_6] : memref<8x256xf32, #tpu.memory_space<vmem>>, vector<8x256xf32>
    tpu.vector_store %arg5[%c0_5, %c0_6], %6 {strides = array<i32>} : memref<8x256xf32, #tpu.memory_space<vmem>>, vector<8x256xf32>,
    return
  }
  func.func @transform_0(%arg0: i32, %arg1: i32) -> (i32, i32) {
    %c0_i32 = arith.constant 0 : i32
    return %arg0, %arg1 : i32, i32
  }
  func.func @transform_1(%arg0: i32, %arg1: i32) -> (i32, i32) {
    %c0_i32 = arith.constant 0 : i32
    %c0_i32_0 = arith.constant 0 : i32
    return %arg0, %c0_i32 : i32, i32
  }
  func.func @transform_2(%arg0: i32, %arg1: i32) -> (i32, i32) {
    %c0_i32 = arith.constant 0 : i32
    %c0_i32_0 = arith.constant 0 : i32
    return %arg0, %c0_i32 : i32, i32
  }
  func.func @transform_3(%arg0: i32, %arg1: i32) -> (i32, i32) {
    %c0_i32 = arith.constant 0 : i32
    return %arg0, %arg1 : i32, i32
  }
}

</mosaic_0001>

<llo_original>
// kernel: switchable_norm_nd.2
$region0: #{switchable_norm_nd.2}
  #allocation0 [shape = 'u32[]', space=smem, size = 0x4, offset = 0x4, fixed_abs, tag = 'smem constant byte address 0x4 - core index']
  #allocation1 [shape = 'u32[144,128]{1,0:T(1,128)}', space=vmem, size = 0x12000, scoped, tag = 'internal scratch']
  %s0 = inlined_call_operand.vmem [shape: f32[8,256], index: 0, kind: input, shape index: {}]
  %s1 = inlined_call_operand.vmem [shape: f32[8,1], index: 1, kind: output, shape index: {0}]
  %s2 = inlined_call_operand.vmem [shape: f32[8,1], index: 2, kind: output, shape index: {1}]
  %3 = xla_tuple %s1, %s2
  %s4 = sld [smem:[#allocation0]]
  $region30: #{switchable_norm_nd.2} parent=0
    _
  %s6 = ssub.s32 1, %s4
  %s7 = scalar_select 0, %s6, %s4
  // Predicated region
  $region2: #{switchable_norm_nd.2} parent=0 // pred_check
    _
  $region3: #{switchable_norm_nd.2} parent=0 // pred_check_branch
    %9 = sbr.rel (0) target = $region5
  $region4: #{switchable_norm_nd.2} parent=0 // pred_region
    _
  $region5: #{switchable_norm_nd.2} parent=0 // pred_fallthru
    _
  %v10 = vld [vmem:[%s0] sm:$0xff]
  %v11 = vld [vmem:[%s0 + $0x8] sm:$0xff]
  %v12 = vadd.f32 %v10, %v11
  %13 = vadd.xlane.f32.xlu0 %v12
  %v14 = vpop.xlane.xlu0 %13
  %v15 = vrcp.pop 256.0
  %v16 = vmul.f32 %v14, %v15
  %v17 = vsub.f32 %v10, %v16
  %v18 = vsub.f32 %v11, %v16
  %v19 = vmul.f32 %v17, %v17
  %v20 = vmul.f32 %v18, %v18
  %v21 = vadd.f32 %v19, %v20
  %22 = vadd.xlane.f32.xlu0 %v21
  %v23 = vpop.xlane.xlu0 %22
  %p24 = scmp.eq.s32.totalorder 0, 0
  // Predicated region
  $region6: #{switchable_norm_nd.2} parent=0 // pred_check
    %p25 = pneg %p24
  $region7: #{switchable_norm_nd.2} parent=0 // pred_check_branch
    %27 = sbr.rel (%p25) target = $region9
  $region8: #{switchable_norm_nd.2} parent=0 // pred_region
    %vm28 = vcmask 7168
    %29 = vst.msk [vmem:[%s1] sm:$0xff] %vm28, %v16
    %30 = vst.msk [vmem:[%s2] sm:$0xff] %vm28, %v23
  $region9: #{switchable_norm_nd.2} parent=0 // pred_fallthru
    _
  %p31 = scmp.gt.s32.totalorder 0, 0
  // Predicated region
  $region10: #{switchable_norm_nd.2} parent=0 // pred_check
    %p32 = pneg %p31
  $region11: #{switchable_norm_nd.2} parent=0 // pred_check_branch
    %34 = sbr.rel (%p32) target = $region13
  $region12: #{switchable_norm_nd.2} parent=0 // pred_region
    %s35 = smul.u32 0, 256
    %s36 = scvt.s32.f32 %s35
    %s37 = sadd.f32 %s36, 256.0
    %v38 = vstv %s37
    %v39 = vrcp.pop %v38
    %s40 = vtos %v39
    %v41 = vld [vmem:[%s1] sm:$0xff]
    %v42 = vsub.f32 %v16, %v41
    %s43 = smul.f32 %s40, 256.0
    %v44 = vstv %s43
    %v45 = vmul.f32 %v42, %v44
    %v46 = vadd.f32 %v41, %v45
    %vm47 = vcmask 7168
    %48 = vst.msk [vmem:[%s1] sm:$0xff] %vm47, %v46
    %v49 = vld [vmem:[%s2] sm:$0xff]
    %v50 = vadd.f32 %v49, %v23
    %v51 = vmul.f32 %v42, %v42
    %s52 = smul.f32 %s36, 256.0
    %s53 = smul.f32 %s52, %s40
    %v54 = vstv %s53
    %v55 = vmul.f32 %v51, %v54
    %v56 = vadd.f32 %v50, %v55
    %57 = vst.msk [vmem:[%s2] sm:$0xff] %vm47, %v56
  $region13: #{switchable_norm_nd.2} parent=0 // pred_fallthru
    _
  // Predicated region
  $region14: #{switchable_norm_nd.2} parent=0 // pred_check
    _
  $region15: #{switchable_norm_nd.2} parent=0 // pred_check_branch
    %59 = sbr.rel (0) target = $region17
  $region16: #{switchable_norm_nd.2} parent=0 // pred_region
    _
  $region17: #{switchable_norm_nd.2} parent=0 // pred_fallthru
    _
  // Predicated region
  $region18: #{switchable_norm_nd.2} parent=0 // pred_check
    _
  $region19: #{switchable_norm_nd.2} parent=0 // pred_check_branch
    %61 = sbr.rel (0) target = $region21
  $region20: #{switchable_norm_nd.2} parent=0 // pred_region
    _
  $region21: #{switchable_norm_nd.2} parent=0 // pred_fallthru
    _
  // Predicated region
  $region22: #{switchable_norm_nd.2} parent=0 // pred_check
    _
  $region23: #{switchable_norm_nd.2} parent=0 // pred_check_branch
    %63 = sbr.rel (0) target = $region25
  $region24: #{switchable_norm_nd.2} parent=0 // pred_region
    _
  $region25: #{switchable_norm_nd.2} parent=0 // pred_fallthru
    _
  // Predicated region
  $region26: #{switchable_norm_nd.2} parent=0 // pred_check
    _
  $region27: #{switchable_norm_nd.2} parent=0 // pred_check_branch
    %65 = sbr.rel (0) target = $region29
  $region28: #{switchable_norm_nd.2} parent=0 // pred_region
    _
  $region29: #{switchable_norm_nd.2} parent=0 // pred_fallthru
    _

// kernel: switchable_norm_nd.3
$region0: #{switchable_norm_nd.3}
  #allocation0 [shape = 'u32[]', space=smem, size = 0x4, offset = 0x4, fixed_abs, tag = 'smem constant byte address 0x4 - core index']
  #allocation1 [shape = 'u32[144,128]{1,0:T(1,128)}', space=vmem, size = 0x12000, scoped, tag = 'internal scratch']
  %s0 = inlined_call_operand.vmem [shape: f32[8,256], index: 0, kind: input, shape index: {}]
  %s1 = inlined_call_operand.vmem [shape: f32[8,1], index: 1, kind: input, shape index: {}]
  %s2 = inlined_call_operand.vmem [shape: f32[8,1], index: 2, kind: input, shape index: {}]
  %s3 = inlined_call_operand.vmem [shape: f32[8,256], index: 3, kind: output, shape index: {}]
  %s4 = sld [smem:[#allocation0]]
  $region22: #{switchable_norm_nd.3} parent=0
    _
  %s6 = ssub.s32 1, %s4
  %s7 = scalar_select 0, %s6, %s4
  // Predicated region
  $region2: #{switchable_norm_nd.3} parent=0 // pred_check
    _
  $region3: #{switchable_norm_nd.3} parent=0 // pred_check_branch
    %9 = sbr.rel (0) target = $region5
  $region4: #{switchable_norm_nd.3} parent=0 // pred_region
    _
  $region5: #{switchable_norm_nd.3} parent=0 // pred_fallthru
    _
  // Predicated region
  $region6: #{switchable_norm_nd.3} parent=0 // pred_check
    _
  $region7: #{switchable_norm_nd.3} parent=0 // pred_check_branch
    %11 = sbr.rel (0) target = $region9
  $region8: #{switchable_norm_nd.3} parent=0 // pred_region
    _
  $region9: #{switchable_norm_nd.3} parent=0 // pred_fallthru
    _
  // Predicated region
  $region10: #{switchable_norm_nd.3} parent=0 // pred_check
    _
  $region11: #{switchable_norm_nd.3} parent=0 // pred_check_branch
    %13 = sbr.rel (0) target = $region13
  $region12: #{switchable_norm_nd.3} parent=0 // pred_region
    _
  $region13: #{switchable_norm_nd.3} parent=0 // pred_fallthru
    _
  %v14 = vld [vmem:[%s0] sm:$0xff]
  %v15 = vld [vmem:[%s0 + $0x8] sm:$0xff]
  %v16 = vld [vmem:[%s1] sm:$0xff]
  %18 = vset.pattern.permute.xlu0 0
  %19 = vperm.xlu0 %18, %v16
  %v20 = vpop.permute.xlu0 %19
  %v22 = vmul.f32 %v14, %v20
  %v23 = vmul.f32 %v15, %v20
  %v24 = vld [vmem:[%s2] sm:$0xff]
  %26 = vset.pattern.permute.xlu0 0
  %27 = vperm.xlu0 %26, %v24
  %v28 = vpop.permute.xlu0 %27
  %v30 = vadd.f32 %v22, %v28
  %v31 = vadd.f32 %v23, %v28
  %32 = vst [vmem:[%s3] sm:$0xff] %v30
  %33 = vst [vmem:[%s3 + $0x8] sm:$0xff] %v31
  // Predicated region
  $region14: #{switchable_norm_nd.3} parent=0 // pred_check
    _
  $region15: #{switchable_norm_nd.3} parent=0 // pred_check_branch
    %35 = sbr.rel (0) target = $region17
  $region16: #{switchable_norm_nd.3} parent=0 // pred_region
    _
  $region17: #{switchable_norm_nd.3} parent=0 // pred_fallthru
    _
  // Predicated region
  $region18: #{switchable_norm_nd.3} parent=0 // pred_check
    _
  $region19: #{switchable_norm_nd.3} parent=0 // pred_check_branch
    %37 = sbr.rel (0) target = $region21
  $region20: #{switchable_norm_nd.3} parent=0 // pred_region
    _
  $region21: #{switchable_norm_nd.3} parent=0 // pred_fallthru
    _

</llo_original>
